<compile_context>
chip_gen: v6e
topology: v6e:2x2x1
jax: 0.10.0
libtpu: 0.0.40
codegen_flags: <defaults>
</compile_context>

<pallas_src>
import functools

import jax
import jax.numpy as jnp
from jax import lax
from jax.experimental import pallas as pl
from jax.experimental.pallas import tpu as pltpu


def make_rope_tables(total_dim, frac, max_position_embeddings, base, position_scale=1.0):
    """Deterministic buffer construction, identical to the PyTorch __init__."""
    assert total_dim % frac == 0
    dim = total_dim // frac
    assert dim % 2 == 0
    freq_ar = jnp.arange(0, dim, 2, dtype=jnp.float32)
    inv_freq = 1.0 / (base ** (freq_ar / dim))                      # (dim/2,)
    pos = jnp.arange(0, max_position_embeddings, dtype=jnp.float32) * position_scale
    freqs = inv_freq[:, None] * pos[None, :]                        # (dim/2, max_pos)
    freqs = freqs.T                                                 # (max_pos, dim/2)
    freqs = jnp.concatenate([freqs, freqs], axis=-1)                # (max_pos, dim)
    return jnp.sin(freqs), jnp.cos(freqs), dim


def _vmem_budget_bytes():
    """~75% of this chip's physical VMEM (fallback 64 MiB if query fails)."""
    cap = 64 * 1024 * 1024
    try:
        cap = int(pltpu.get_tpu_info().vmem_capacity_bytes)
    except Exception:
        pass
    return (cap * 3) // 4


def _choose_s_tile(S, per_pos_bytes, budget_bytes):
    """Largest S tile (multiple of 8, divisor of S) whose double-buffered
    working set fits the VMEM budget.  Falls back to the smallest legal tile
    (or the full axis) if nothing fits / divides."""
    candidates = (1024, 512, 256, 128, 64, 32, 16, 8)
    for c in candidates:
        if S % c == 0 and c * per_pos_bytes <= budget_bytes:
            return c
    for c in reversed(candidates):          # smallest divisor, even if over budget
        if S % c == 0:
            return c
    return S                                 # odd / tiny S: full axis is always legal


def _build_compact_table(sin_g, cos_g, total_dim):
    """Compact per-position table, shape (Bt, 2, S, total_dim), f32.

    Plane 0 (cos):   cos[d] on rotated lanes, 1.0 on pass-through lanes.
    Plane 1 (pmsin): +sin[d] for d in [0, half), -sin[d] for d in [half, dim),
                     0 on pass-through lanes.
    Correctness of the in-kernel rolls relies on explicit lane masks in the
    kernel (NOT on zero padding), so this layout is safe for any even
    dim <= total_dim.
    """
    dim = sin_g.shape[-1]
    half = dim // 2
    pad = total_dim - dim
    lead = sin_g.shape[:-1]

    cos_p = cos_g
    pm_p = jnp.concatenate([sin_g[..., :half], -sin_g[..., half:]], axis=-1)
    if pad > 0:
        cos_p = jnp.concatenate([cos_p, jnp.ones(lead + (pad,), cos_g.dtype)], axis=-1)
        pm_p = jnp.concatenate([pm_p, jnp.zeros(lead + (pad,), sin_g.dtype)], axis=-1)
    return jnp.stack([cos_p, pm_p], axis=1)                  # (Bt, 2, S, total_dim)


def _rope_kernel(tab_ref, x_ref, o_ref, *, half, rot_dim):
    # tab_ref: (1, 2, S_TILE, D) f32 ; x_ref/o_ref: (1, H, S_TILE, D)
    x = x_ref[0].astype(jnp.float32)              # (H, S_TILE, D)
    tab = tab_ref[0]                              # (2, S_TILE, D)
    cos = tab[0]                                  # broadcast over heads (free)
    pmsin = tab[1]

    d_lanes = x.shape[-1]
    lane = lax.broadcasted_iota(jnp.int32, (1, 1, d_lanes), 2)

    xs = x * pmsin                                # (H, S_TILE, D)
    # out[d] += xs[d + half]   for d in [0, half)            (rotate_half, -x2*sin)
    # out[d] += xs[d - half]   for d in [half, rot_dim)       (rotate_half, +x1*sin)
    # pass-through lanes d >= rot_dim get x * 1.0 only.
    contrib_a = pltpu.roll(xs, d_lanes - half, axis=2)   # [d] = xs[(d + half) mod D]
    contrib_b = pltpu.roll(xs, half, axis=2)             # [d] = xs[(d - half) mod D]
    rot = jnp.where(lane < half, contrib_a,
                    jnp.where(lane < rot_dim, contrib_b, 0.0))

    o_ref[0] = (x * cos + rot).astype(o_ref.dtype)


def rotary_embedding(x, position_ids, sin_emb, cos_emb, dim):
    """x: [B, H, S, total_dim]; position_ids: [B, S] int32 or None."""
    B, H, S, D = x.shape
    assert dim % 2 == 0 and dim <= D
    half = dim // 2

    # Plain-JAX glue: gather sin/cos (== F.embedding) and build the compact table.
    if position_ids is None:
        assert S <= sin_emb.shape[0], "sequence longer than max_position_embeddings"
        sin_g = sin_emb[:S][None]                        # (1, S, dim)
        cos_g = cos_emb[:S][None]
        Bt = 1
    else:
        sin_g = jnp.take(sin_emb, position_ids, axis=0)  # (B, S, dim)
        cos_g = jnp.take(cos_emb, position_ids, axis=0)
        Bt = B
    tab = _build_compact_table(sin_g, cos_g, D).astype(jnp.float32)   # (Bt, 2, S, D)

    # VMEM-aware sequence tile: double-buffered (x + out + table) per position.
    budget = _vmem_budget_bytes()
    per_pos = 2 * (2 * H * D * x.dtype.itemsize + 2 * D * 4)
    S_TILE = _choose_s_tile(S, per_pos, budget)
    n_s = S // S_TILE if S % S_TILE == 0 else 1

    if Bt > 1:
        tab_index = lambda s, b: (b, 0, s, 0)
    else:
        tab_index = lambda s, b: (0, 0, s, 0)   # constant over inner b -> no re-DMA

    kernel = functools.partial(_rope_kernel, half=half, rot_dim=dim)

    grid_spec = pltpu.PrefetchScalarGridSpec(
        num_scalar_prefetch=0,
        grid=(n_s, B),                                   # B innermost
        in_specs=[
            pl.BlockSpec((1, 2, S_TILE, D), tab_index),
            pl.BlockSpec((1, H, S_TILE, D), lambda s, b: (b, 0, s, 0)),
        ],
        out_specs=pl.BlockSpec((1, H, S_TILE, D), lambda s, b: (b, 0, s, 0)),
    )

    return pl.pallas_call(
        kernel,
        out_shape=jax.ShapeDtypeStruct((B, H, S, D), x.dtype),
        grid_spec=grid_spec,
        compiler_params=pltpu.CompilerParams(
            dimension_semantics=("parallel", "parallel"),
            vmem_limit_bytes=int(budget),
        ),
    )(tab, x)


def rotary_embedding_ref(x, position_ids, sin_emb, cos_emb, dim):
    """Pure-JAX reference mirroring the PyTorch forward."""
    B, H, S, total_dim = x.shape
    if position_ids is None:
        sin = sin_emb[:S][None]
        cos = cos_emb[:S][None]
    else:
        sin = jnp.take(sin_emb, position_ids, axis=0)
        cos = jnp.take(cos_emb, position_ids, axis=0)
    sin = sin[:, None, :, :]
    cos = cos[:, None, :, :]

    def rotate_half(t):
        h = t.shape[-1] // 2
        return jnp.concatenate([-t[..., h:], t[..., :h]], axis=-1)

    if dim == total_dim:
        return x * cos + rotate_half(x) * sin
    rot, no_rot = x[..., :dim], x[..., dim:]
    rot = rot * cos + rotate_half(rot) * sin
    return jnp.concatenate([rot, no_rot], axis=-1)


if __name__ == "__main__":
    # Module config: total_dim=32, frac=2 -> rotated dim=16 (partial RoPE).
    total_dim = 32
    frac = 2
    max_position_embeddings = 64
    base = 10000.0
    position_scale = 1.0

    sin_emb, cos_emb, dim = make_rope_tables(
        total_dim, frac, max_position_embeddings, base, position_scale
    )

    B, H, S = 2, 4, 8
    key = jax.random.PRNGKey(0)
    kx, kp = jax.random.split(key)
    x = jax.random.normal(kx, (B, H, S, total_dim), dtype=jnp.float32)
    position_ids = jax.random.randint(kp, (B, S), 0, max_position_embeddings, dtype=jnp.int32)

    # Partial RoPE with position_ids.
    out = jax.block_until_ready(rotary_embedding(x, position_ids, sin_emb, cos_emb, dim))
    ref = rotary_embedding_ref(x, position_ids, sin_emb, cos_emb, dim)
    assert out.shape == x.shape and out.dtype == x.dtype
    assert jnp.allclose(out, ref, atol=1e-5, rtol=1e-5), "mismatch vs reference"

    # Partial RoPE, position_ids=None path (single shared table, re-DMA skipped).
    out2 = jax.block_until_ready(rotary_embedding(x, None, sin_emb, cos_emb, dim))
    ref2 = rotary_embedding_ref(x, None, sin_emb, cos_emb, dim)
    assert jnp.allclose(out2, ref2, atol=1e-5, rtol=1e-5), "mismatch vs reference (no pos ids)"

    # Full-dim RoPE (frac=1) to exercise the dim == total_dim branch.
    sin_f, cos_f, dim_f = make_rope_tables(total_dim, 1, max_position_embeddings, base, 1.0)
    out3 = jax.block_until_ready(rotary_embedding(x, position_ids, sin_f, cos_f, dim_f))
    ref3 = rotary_embedding_ref(x, position_ids, sin_f, cos_f, dim_f)
    assert jnp.allclose(out3, ref3, atol=1e-5, rtol=1e-5), "mismatch vs reference (full dim)"

    print("KERNEL_OK")
</pallas_src>

<mosaic_0001>
module attributes {stable_mosaic.version = 11 : i64} {
  func.func @_rope_kernel(%arg0: i32, %arg1: i32, %arg2: memref<1x2x8x32xf32, #tpu.memory_space<vmem>>, %arg3: memref<1x4x8x32xf32, #tpu.memory_space<vmem>>, %arg4: memref<1x4x8x32xf32, #tpu.memory_space<vmem>>) attributes {dimension_semantics = [#tpu.dimension_semantics<parallel>, #tpu.dimension_semantics<parallel>], iteration_bounds = array<i64: 1, 2>, scalar_prefetch = 0 : i64, scratch_operands = 0 : i64, tpu.core_type = #tpu.core_type<tc>, window_params = [{transform_indices = @transform_0, window_bounds = array<i64: 1, 2, 8, 32>}, {transform_indices = @transform_1, window_bounds = array<i64: 1, 4, 8, 32>}, {transform_indices = @transform_2, window_bounds = array<i64: 1, 4, 8, 32>}]} {
    %c0 = arith.constant 0 : index
    %c0_0 = arith.constant 0 : index
    %c0_1 = arith.constant 0 : index
    %c0_2 = arith.constant 0 : index
    %0 = vector.load %arg3[%c0, %c0_0, %c0_1, %c0_2] : memref<1x4x8x32xf32, #tpu.memory_space<vmem>>, vector<1x4x8x32xf32>
    %1 = vector.shape_cast %0 : vector<1x4x8x32xf32> to vector<4x8x32xf32>
    %c0_3 = arith.constant 0 : index
    %c0_4 = arith.constant 0 : index
    %c0_5 = arith.constant 0 : index
    %c0_6 = arith.constant 0 : index
    %2 = vector.load %arg2[%c0_3, %c0_4, %c0_5, %c0_6] : memref<1x2x8x32xf32, #tpu.memory_space<vmem>>, vector<1x2x8x32xf32>
    %3 = vector.shape_cast %2 : vector<1x2x8x32xf32> to vector<2x8x32xf32>
    %4 = vector.extract_strided_slice %3 {offsets = [0, 0, 0], sizes = [1, 8, 32], strides = [1, 1, 1]} : vector<2x8x32xf32> to vector<1x8x32xf32>
    %5 = vector.shape_cast %4 : vector<1x8x32xf32> to vector<8x32xf32>
    %6 = vector.extract_strided_slice %3 {offsets = [1, 0, 0], sizes = [1, 8, 32], strides = [1, 1, 1]} : vector<2x8x32xf32> to vector<1x8x32xf32>
    %7 = vector.shape_cast %6 : vector<1x8x32xf32> to vector<8x32xf32>
    %8 = tpu.iota {dimensions = array<i32: 2>} : vector<1x1x32xi32>
    %9 = vector.shape_cast %7 : vector<8x32xf32> to vector<1x8x32xf32>
    %10 = vector.broadcast %9 : vector<1x8x32xf32> to vector<4x8x32xf32>
    %11 = arith.mulf %1, %10 : vector<4x8x32xf32>
    %c24_i32 = arith.constant 24 : i32
    %12 = tpu.dynamic_rotate %11 by %c24_i32 dim 2 : vector<4x8x32xf32>, i32 -> vector<4x8x32xf32>
    %c8_i32 = arith.constant 8 : i32
    %13 = tpu.dynamic_rotate %11 by %c8_i32 dim 2 : vector<4x8x32xf32>, i32 -> vector<4x8x32xf32>
    %c8_i32_7 = arith.constant 8 : i32
    %14 = vector.broadcast %c8_i32_7 : i32 to vector<1x1x32xi32>
    %15 = arith.cmpi slt, %8, %14 : vector<1x1x32xi32>
    %c16_i32 = arith.constant 16 : i32
    %16 = vector.broadcast %c16_i32 : i32 to vector<1x1x32xi32>
    %17 = arith.cmpi slt, %8, %16 : vector<1x1x32xi32>
    %cst = arith.constant 0.000000e+00 : f32
    %18 = vector.shape_cast %17 : vector<1x1x32xi1> to vector<1x1x32xi1>
    %19 = vector.broadcast %18 : vector<1x1x32xi1> to vector<4x8x32xi1>
    %20 = vector.broadcast %cst : f32 to vector<4x8x32xf32>
    %21 = arith.select %19, %13, %20 : vector<4x8x32xi1>, vector<4x8x32xf32>
    %22 = vector.shape_cast %15 : vector<1x1x32xi1> to vector<1x1x32xi1>
    %23 = vector.broadcast %22 : vector<1x1x32xi1> to vector<4x8x32xi1>
    %24 = arith.select %23, %12, %21 : vector<4x8x32xi1>, vector<4x8x32xf32>
    %25 = vector.shape_cast %5 : vector<8x32xf32> to vector<1x8x32xf32>
    %26 = vector.broadcast %25 : vector<1x8x32xf32> to vector<4x8x32xf32>
    %27 = arith.mulf %1, %26 : vector<4x8x32xf32>
    %28 = arith.addf %27, %24 : vector<4x8x32xf32>
    %c0_8 = arith.constant 0 : index
    %c0_9 = arith.constant 0 : index
    %c0_10 = arith.constant 0 : index
    %c0_11 = arith.constant 0 : index
    %29 = vector.load %arg4[%c0_8, %c0_9, %c0_10, %c0_11] : memref<1x4x8x32xf32, #tpu.memory_space<vmem>>, vector<1x4x8x32xf32>
    %30 = vector.shape_cast %29 : vector<1x4x8x32xf32> to vector<4x8x32xf32>
    %31 = vector.shape_cast %28 : vector<4x8x32xf32> to vector<1x4x8x32xf32>
    tpu.vector_store %arg4[%c0_8, %c0_9, %c0_10, %c0_11], %31 {strides = array<i32>} : memref<1x4x8x32xf32, #tpu.memory_space<vmem>>, vector<1x4x8x32xf32>,
    return
  }
  func.func @transform_0(%arg0: i32, %arg1: i32) -> (i32, i32, i32, i32) {
    %c0_i32 = arith.constant 0 : i32
    %c0_i32_0 = arith.constant 0 : i32
    %c0_i32_1 = arith.constant 0 : i32
    return %arg1, %c0_i32, %arg0, %c0_i32_0 : i32, i32, i32, i32
  }
  func.func @transform_1(%arg0: i32, %arg1: i32) -> (i32, i32, i32, i32) {
    %c0_i32 = arith.constant 0 : i32
    %c0_i32_0 = arith.constant 0 : i32
    %c0_i32_1 = arith.constant 0 : i32
    return %arg1, %c0_i32, %arg0, %c0_i32_0 : i32, i32, i32, i32
  }
  func.func @transform_2(%arg0: i32, %arg1: i32) -> (i32, i32, i32, i32) {
    %c0_i32 = arith.constant 0 : i32
    %c0_i32_0 = arith.constant 0 : i32
    %c0_i32_1 = arith.constant 0 : i32
    return %arg1, %c0_i32, %arg0, %c0_i32_0 : i32, i32, i32, i32
  }
}

</mosaic_0001>

<llo_original>
// kernel: tpu_custom_call.1
$region0: #{tpu_custom_call.1}
  #allocation0 [shape = 'u32[]', space=smem, size = 0x4, offset = 0x4, fixed_abs, tag = 'smem constant byte address 0x4 - core index']
  #allocation1 [shape = 'u32[144,128]{1,0:T(1,128)}', space=vmem, size = 0x12000, scoped, tag = 'internal scratch']
  %s0 = inlined_call_operand.hbm [shape: f32[2,2,8,32], index: 0, kind: input, shape index: {}]
  %s1 = inlined_call_operand.hbm [shape: f32[2,4,8,32], index: 1, kind: input, shape index: {}]
  %s2 = inlined_call_operand.hbm [shape: f32[2,4,8,32], index: 2, kind: output, shape index: {}]
  %s3 = sld [smem:[#allocation0]]
  $region49: #{tpu_custom_call.1} parent=0
    _
  %s5 = ssub.s32 1, %s3
  %s6 = scalar_select 0, %s5, %s3
  $region1: #{tpu_custom_call.1} parent=0
    #allocation2 [shape = 'u8[16384]{0}', space=vmem, size = 0x4000, scoped, tag = 'input window, operand 0']
    #allocation3 [shape = 's32[2]{0}', space=sflag, size = 0x8, scoped, tag = 'scoped memory for tpu_custom_call.1']
    #allocation4 [shape = 's32[2]{0}', space=sflag, size = 0x8, scoped, tag = 'scoped memory for tpu_custom_call.1']
    #allocation5 [shape = 'u8[32768]{0}', space=vmem, size = 0x8000, scoped, tag = 'input window, operand 1']
    #allocation6 [shape = 's32[2]{0}', space=sflag, size = 0x8, scoped, tag = 'scoped memory for tpu_custom_call.1']
    #allocation7 [shape = 'u8[32768]{0}', space=vmem, size = 0x8000, scoped, tag = 'output window, operand 0']
    %7 = vsyncpa [#allocation3], 0
    %s8 = scalar_lea.sflag [#allocation3], 1
    %9 = vsyncpa %s8, 0
    %10 = vsyncpa [#allocation6], 0
    %s11 = scalar_lea.sflag [#allocation6], 1
    %12 = vsyncpa %s11, 0
    %13 = vsyncpa [#allocation4], 0
    %s14 = scalar_lea.sflag [#allocation4], 1
    %15 = vsyncpa %s14, 0
    loop: start=0, step=1, limit=4
    $region2: #{tpu_custom_call.1} parent=1 // loop_pre_header
      _
    $region3: #{tpu_custom_call.1} parent=1 // loop_header
      %s17 = sphi 0, %s21
      %p18 = scmp.ge.s32.totalorder %s17, 4
      %s24 = sphi 0, %s36
      %s25 = sphi 0, %s32
      %s26 = sphi 0, %s24
      %s27 = sphi 0, %s25
      %s28 = sphi 0, %s26
      %s29 = sphi 0, %s27
      %s41 = sphi 0, %s43
      %s44 = sphi 0, %s41
      %s45 = sphi 0, %s44
      %s61 = sphi 0, %s45
      %s69 = sphi 0, %s71
      %s72 = sphi 0, %s69
      %s73 = sphi 0, %s72
      %s89 = sphi 0, %s73
      %s97 = sphi 0, %s99
      %s100 = sphi 0, %s97
      %s101 = sphi 0, %s100
      %s117 = sphi 0, %s101
    $region4: #{tpu_custom_call.1} parent=1 // loop_header_branch
      %20 = sbr.rel (%p18) target = $region8
    $region5: #{tpu_custom_call.1} parent=1 // loop_body
      %s22 = ssub.s32 %s17, 1
      %s23 = ssub.s32 %s17, 2
      %s30 = sadd.s32 1, %s25
      %p31 = scmp.ge.s32.totalorder %s30, 2
      %s32 = scalar_select %p31, 0, %s30
      %s33 = sadd.s32 1, %s24
      %s34 = scalar_select %p31, %s33, %s24
      %p35 = scmp.ge.s32.totalorder %s34, 1
      %s36 = scalar_select %p35, 0, %s34
      %s37 = ssub.s32 %s25, %s32
      %s38 = ssub.s32 %s24, %s36
      %s39 = sor.u32 %s37, %s38
      %p40 = scmp.eq.s32.totalorder %s39, 0
      %s42 = sadd.s32 %s41, 1
      %s43 = scalar_select %p40, %s41, %s42
      %p46 = pneg %p40
      %p47 = scmp.eq.s32.totalorder %s17, 1
      %p48 = por %p46, %p47
      %p49 = scmp.ne.s32.totalorder %s41, %s44
      %p50 = scmp.eq.s32.totalorder %s17, 0
      %p51 = por %p49, %p50
      %p52 = scmp.ne.s32.totalorder %s41, %s44
      %p53 = scmp.eq.s32.totalorder %s22, 1
      %p54 = por %p52, %p53
      %p55 = scmp.ne.s32.totalorder %s44, %s45
      %p56 = scmp.eq.s32.totalorder %s22, 0
      %p57 = por %p55, %p56
      %p58 = scmp.ne.s32.totalorder %s44, %s45
      %p59 = scmp.eq.s32.totalorder %s23, 1
      %p60 = por %p58, %p59
      %p62 = scmp.ne.s32.totalorder %s45, %s61
      %p63 = scmp.eq.s32.totalorder %s23, 0
      %p64 = por %p62, %p63
      %s65 = ssub.s32 %s25, %s32
      %s66 = ssub.s32 %s24, %s36
      %s67 = sor.u32 %s65, %s66
      %p68 = scmp.eq.s32.totalorder %s67, 0
      %s70 = sadd.s32 %s69, 1
      %s71 = scalar_select %p68, %s69, %s70
      %p74 = pneg %p68
      %p75 = scmp.eq.s32.totalorder %s17, 1
      %p76 = por %p74, %p75
      %p77 = scmp.ne.s32.totalorder %s69, %s72
      %p78 = scmp.eq.s32.totalorder %s17, 0
      %p79 = por %p77, %p78
      %p80 = scmp.ne.s32.totalorder %s69, %s72
      %p81 = scmp.eq.s32.totalorder %s22, 1
      %p82 = por %p80, %p81
      %p83 = scmp.ne.s32.totalorder %s72, %s73
      %p84 = scmp.eq.s32.totalorder %s22, 0
      %p85 = por %p83, %p84
      %p86 = scmp.ne.s32.totalorder %s72, %s73
      %p87 = scmp.eq.s32.totalorder %s23, 1
      %p88 = por %p86, %p87
      %p90 = scmp.ne.s32.totalorder %s73, %s89
      %p91 = scmp.eq.s32.totalorder %s23, 0
      %p92 = por %p90, %p91
      %s93 = ssub.s32 %s25, %s32
      %s94 = ssub.s32 %s24, %s36
      %s95 = sor.u32 %s93, %s94
      %p96 = scmp.eq.s32.totalorder %s95, 0
      %s98 = sadd.s32 %s97, 1
      %s99 = scalar_select %p96, %s97, %s98
      %p102 = pneg %p96
      %p103 = scmp.eq.s32.totalorder %s17, 1
      %p104 = por %p102, %p103
      %p105 = scmp.ne.s32.totalorder %s97, %s100
      %p106 = scmp.eq.s32.totalorder %s17, 0
      %p107 = por %p105, %p106
      %p108 = scmp.ne.s32.totalorder %s97, %s100
      %p109 = scmp.eq.s32.totalorder %s22, 1
      %p110 = por %p108, %p109
      %p111 = scmp.ne.s32.totalorder %s100, %s101
      %p112 = scmp.eq.s32.totalorder %s22, 0
      %p113 = por %p111, %p112
      %p114 = scmp.ne.s32.totalorder %s100, %s101
      %p115 = scmp.eq.s32.totalorder %s23, 1
      %p116 = por %p114, %p115
      %p118 = scmp.ne.s32.totalorder %s101, %s117
      %p119 = scmp.eq.s32.totalorder %s23, 0
      %p120 = por %p118, %p119
      %p121 = scmp.le.s32.totalorder 1, %s17
      %p122 = scmp.lt.s32.totalorder %s17, 3
      %p123 = pnand %p121, %p122
      %p124 = pneg %p123
      // Predicated region
      $region9: #{tpu_custom_call.1} parent=5 // pred_check
        _
      $region10: #{tpu_custom_call.1} parent=5 // pred_check_branch
        %126 = sbr.rel (%p123) target = $region12
      $region11: #{tpu_custom_call.1} parent=5 // pred_region
        %s127 = ssub.s32 %s17, 1
      $region12: #{tpu_custom_call.1} parent=5 // pred_fallthru
        _
      %p128 = scmp.lt.s32.totalorder %s17, 2
      // Predicated region
      $region13: #{tpu_custom_call.1} parent=5 // pred_check
        %p129 = pneg %p128
      $region14: #{tpu_custom_call.1} parent=5 // pred_check_branch
        %131 = sbr.rel (%p129) target = $region16
      $region15: #{tpu_custom_call.1} parent=5 // pred_region
        // Predicated region
        $region17: #{tpu_custom_call.1} parent=15 // pred_check
          %p132 = pneg %p51
        $region18: #{tpu_custom_call.1} parent=15 // pred_check_branch
          %134 = sbr.rel (%p132) target = $region20
        $region19: #{tpu_custom_call.1} parent=15 // pred_region
          %s135 = sand.u32 %s41, 1
          %s136 = scalar_lea.sflag [#allocation3], %s135
          %s137 = sand.u32 %s41, 1
          %s138 = smul.addr %s137, 16
          %s139 = scalar_lea.vmem [#allocation2], %s138
          %s141 = ssub.s32 256, 256
          %142 = vsyncadd %s136, %s141
          %s143 = smul.addr %s25, 2
          %s144 = sadd.s32 %s24, %s143
          %s145 = smul.addr %s144, 128
          %s146 = scalar_lea.hbm %s0, %s145
          %s147 = sshll.u32 %s139, 4
          %s148 = int_to_ptr.vmem [resolvable:$true] %s147
          %153 = dma.hbm_to_vmem [thread:$0]  %s146, 256, %s148, %s136, 128, 128, 8
        $region20: #{tpu_custom_call.1} parent=15 // pred_fallthru
          _
        // Predicated region
        $region21: #{tpu_custom_call.1} parent=15 // pred_check
          %p154 = pneg %p79
        $region22: #{tpu_custom_call.1} parent=15 // pred_check_branch
          %156 = sbr.rel (%p154) target = $region24
        $region23: #{tpu_custom_call.1} parent=15 // pred_region
          %s157 = sand.u32 %s69, 1
          %s158 = scalar_lea.sflag [#allocation6], %s157
          %s159 = sand.u32 %s69, 1
          %s160 = smul.addr %s159, 32
          %s161 = scalar_lea.vmem [#allocation5], %s160
          %s163 = ssub.s32 512, 512
          %164 = vsyncadd %s158, %s163
          %s165 = smul.addr %s25, 4
          %s166 = sadd.s32 %s24, %s165
          %s167 = smul.addr %s166, 128
          %s168 = scalar_lea.hbm %s1, %s167
          %s169 = sshll.u32 %s161, 4
          %s170 = int_to_ptr.vmem [resolvable:$true] %s169
          %175 = dma.hbm_to_vmem [thread:$0]  %s168, 512, %s170, %s158, 128, 128, 8
        $region24: #{tpu_custom_call.1} parent=15 // pred_fallthru
          _
      $region16: #{tpu_custom_call.1} parent=5 // pred_fallthru
        _
      %p176 = scmp.le.s32.totalorder 1, %s17
      %p177 = scmp.lt.s32.totalorder %s17, 3
      %p178 = pnand %p176, %p177
      %p179 = pneg %p178
      // Predicated region
      $region25: #{tpu_custom_call.1} parent=5 // pred_check
        _
      $region26: #{tpu_custom_call.1} parent=5 // pred_check_branch
        %181 = sbr.rel (%p178) target = $region28
      $region27: #{tpu_custom_call.1} parent=5 // pred_region
        %s182 = ssub.s32 %s17, 1
        %s183 = sand.u32 %s44, 1
        %s184 = scalar_lea.sflag [#allocation3], %s183
        %s185 = sand.u32 %s44, 1
        %s186 = smul.addr %s185, 16
        %s187 = scalar_lea.vmem [#allocation2], %s186
        // Predicated region
        $region29: #{tpu_custom_call.1} parent=27 // pred_check
          %p188 = pneg %p57
        $region30: #{tpu_custom_call.1} parent=27 // pred_check_branch
          %190 = sbr.rel (%p188) target = $region32
        $region31: #{tpu_custom_call.1} parent=27 // pred_region
          %191 = dma.done %s184, 256
        $region32: #{tpu_custom_call.1} parent=27 // pred_fallthru
          _
        %s192 = sand.u32 %s72, 1
        %s193 = scalar_lea.sflag [#allocation6], %s192
        %s194 = sand.u32 %s72, 1
        %s195 = smul.addr %s194, 32
        %s196 = scalar_lea.vmem [#allocation5], %s195
        // Predicated region
        $region33: #{tpu_custom_call.1} parent=27 // pred_check
          %p197 = pneg %p85
        $region34: #{tpu_custom_call.1} parent=27 // pred_check_branch
          %199 = sbr.rel (%p197) target = $region36
        $region35: #{tpu_custom_call.1} parent=27 // pred_region
          %200 = dma.done %s193, 512
        $region36: #{tpu_custom_call.1} parent=27 // pred_fallthru
          _
        %s201 = sand.u32 %s44, 1
        %s202 = scalar_lea.sflag [#allocation3], %s201
        %s203 = sand.u32 %s44, 1
        %s204 = smul.addr %s203, 16
        %s205 = scalar_lea.vmem [#allocation2], %s204
        %p206 = pneg %p57
        %p207 = pneg %p54
        %s208 = sand.u32 %s72, 1
        %s209 = scalar_lea.sflag [#allocation6], %s208
        %s210 = sand.u32 %s72, 1
        %s211 = smul.addr %s210, 32
        %s212 = scalar_lea.vmem [#allocation5], %s211
        %p213 = pneg %p85
        %p214 = pneg %p82
        %p215 = pneg %p113
        %p216 = pneg %p110
        %s217 = sand.u32 %s100, 1
        %s218 = scalar_lea.sflag [#allocation4], %s217
        %s219 = sand.u32 %s100, 1
        %s220 = smul.addr %s219, 32
        %s221 = scalar_lea.vmem [#allocation7], %s220
        %v222 = vld [vmem:[%s196] sm:$0xff]
        %v223 = vld [vmem:[%s196 + $0x8] sm:$0xff]
        %v224 = vld [vmem:[%s196 + $0x10] sm:$0xff]
        %v225 = vld [vmem:[%s196 + $0x18] sm:$0xff]
        %v226 = vld [vmem:[%s187] sm:$0xff]
        %v227 = vld [vmem:[%s187 + $0x8] sm:$0xff]
        %v228 = vlaneseq
        %v229 = vand.u32 %v228, 127
        %v230 = vmul.f32 %v222, %v227
        %v231 = vmul.f32 %v223, %v227
        %v232 = vmul.f32 %v224, %v227
        %v233 = vmul.f32 %v225, %v227
        %vm234 = vcmask 1047808
        %235 = vrot.lane.b32.xlu0 %v230, 32
        %v236 = vpop.permute.xlu0 %235
        %v237 = vsel %vm234, %v236, %v230
        %238 = vrot.lane.b32.xlu0 %v231, 32
        %v239 = vpop.permute.xlu0 %238
        %v240 = vsel %vm234, %v239, %v231
        %241 = vrot.lane.b32.xlu0 %v232, 32
        %v242 = vpop.permute.xlu0 %241
        %v243 = vsel %vm234, %v242, %v232
        %244 = vrot.lane.b32.xlu0 %v233, 32
        %v245 = vpop.permute.xlu0 %244
        %v246 = vsel %vm234, %v245, %v233
        %247 = vrot.lane.b32.xlu0 %v237, 32
        %v248 = vpop.permute.xlu0 %247
        %249 = vrot.lane.b32.xlu0 %v240, 32
        %v250 = vpop.permute.xlu0 %249
        %251 = vrot.lane.b32.xlu0 %v243, 32
        %v252 = vpop.permute.xlu0 %251
        %253 = vrot.lane.b32.xlu0 %v246, 32
        %v254 = vpop.permute.xlu0 %253
        %v255 = vsel %vm234, %v248, %v230
        %v256 = vsel %vm234, %v250, %v231
        %v257 = vsel %vm234, %v252, %v232
        %v258 = vsel %vm234, %v254, %v233
        %vm259 = vcmp.lt.s32.totalorder %v229, 8
        %vm260 = vcmp.lt.s32.totalorder %v229, 16
        %v261 = vsel %vm260, 1, 0
        %vm262 = vcmp.eq.s32.totalorder %v261, 1
        %267 = vrot.lane.b32.xlu0 %v255, 104
        %v268 = vpop.permute.xlu0 %267
        %269 = vrot.lane.b32.xlu0 %v256, 104
        %v270 = vpop.permute.xlu0 %269
        %271 = vrot.lane.b32.xlu0 %v257, 104
        %v272 = vpop.permute.xlu0 %271
        %273 = vrot.lane.b32.xlu0 %v258, 104
        %v274 = vpop.permute.xlu0 %273
        %v279 = vsel %vm262, %v268, 0.0
        %v280 = vsel %vm262, %v270, 0.0
        %v281 = vsel %vm262, %v272, 0.0
        %v282 = vsel %vm262, %v274, 0.0
        %v283 = vsel %vm259, 1, 0
        %vm284 = vcmp.eq.s32.totalorder %v283, 1
        %285 = vrot.lane.b32.xlu0 %v255, 120
        %v286 = vpop.permute.xlu0 %285
        %287 = vrot.lane.b32.xlu0 %v256, 120
        %v288 = vpop.permute.xlu0 %287
        %289 = vrot.lane.b32.xlu0 %v257, 120
        %v290 = vpop.permute.xlu0 %289
        %291 = vrot.lane.b32.xlu0 %v258, 120
        %v292 = vpop.permute.xlu0 %291
        %v297 = vsel %vm284, %v286, %v279
        %v298 = vsel %vm284, %v288, %v280
        %v299 = vsel %vm284, %v290, %v281
        %v300 = vsel %vm284, %v292, %v282
        %v301 = vmul.f32 %v222, %v226
        %v302 = vmul.f32 %v223, %v226
        %v303 = vmul.f32 %v224, %v226
        %v304 = vmul.f32 %v225, %v226
        %v305 = vadd.f32 %v301, %v297
        %v306 = vadd.f32 %v302, %v298
        %v307 = vadd.f32 %v303, %v299
        %v308 = vadd.f32 %v304, %v300
        %vm309 = vcmask 261120
        %310 = vst.msk [vmem:[%s221] sm:$0xff] %vm309, %v305
        %311 = vst.msk [vmem:[%s221 + $0x8] sm:$0xff] %vm309, %v306
        %312 = vst.msk [vmem:[%s221 + $0x10] sm:$0xff] %vm309, %v307
        %313 = vst.msk [vmem:[%s221 + $0x18] sm:$0xff] %vm309, %v308
        %s314 = sand.u32 %s100, 1
        %s315 = scalar_lea.sflag [#allocation4], %s314
        %s316 = sand.u32 %s100, 1
        %s317 = smul.addr %s316, 32
        %s318 = scalar_lea.vmem [#allocation7], %s317
        // Predicated region
        $region37: #{tpu_custom_call.1} parent=27 // pred_check
          %p319 = pneg %p110
        $region38: #{tpu_custom_call.1} parent=27 // pred_check_branch
          %321 = sbr.rel (%p319) target = $region40
        $region39: #{tpu_custom_call.1} parent=27 // pred_region
          %s323 = ssub.s32 512, 512
          %324 = vsyncadd %s315, %s323
          %s325 = smul.addr %s27, 4
          %s326 = sadd.s32 %s26, %s325
          %s327 = smul.addr %s326, 128
          %s328 = scalar_lea.hbm %s2, %s327
          %s329 = sshll.u32 %s318, 4
          %s330 = int_to_ptr.vmem [resolvable:$true] %s329
          %335 = dma.vmem_to_hbm [thread:$0]  %s330, 512, %s328, %s315, 128, 128, 8
        $region40: #{tpu_custom_call.1} parent=27 // pred_fallthru
          _
      $region28: #{tpu_custom_call.1} parent=5 // pred_fallthru
        _
      %p336 = scmp.le.s32.totalorder 2, %s17
      // Predicated region
      $region41: #{tpu_custom_call.1} parent=5 // pred_check
        %p337 = pneg %p336
      $region42: #{tpu_custom_call.1} parent=5 // pred_check_branch
        %339 = sbr.rel (%p337) target = $region44
      $region43: #{tpu_custom_call.1} parent=5 // pred_region
        %s340 = ssub.s32 %s17, 2
        // Predicated region
        $region45: #{tpu_custom_call.1} parent=43 // pred_check
          %p341 = pneg %p116
        $region46: #{tpu_custom_call.1} parent=43 // pred_check_branch
          %343 = sbr.rel (%p341) target = $region48
        $region47: #{tpu_custom_call.1} parent=43 // pred_region
          %s344 = sand.u32 %s101, 1
          %s345 = scalar_lea.sflag [#allocation4], %s344
          %s346 = sand.u32 %s101, 1
          %s347 = smul.addr %s346, 32
          %s348 = scalar_lea.vmem [#allocation7], %s347
          %349 = dma.done %s345, 512
        $region48: #{tpu_custom_call.1} parent=43 // pred_fallthru
          _
      $region44: #{tpu_custom_call.1} parent=5 // pred_fallthru
        _
    $region6: #{tpu_custom_call.1} parent=1 // loop_footer
      %s21 = sadd.s32 1, %s17
    $region7: #{tpu_custom_call.1} parent=1 // loop_footer_branch
      %16 = sbr.rel target = $region3
    $region8: #{tpu_custom_call.1} parent=1 // loop_exit
      _
    %350 = vsyncpa [#allocation3], 1
    %s351 = scalar_lea.sflag [#allocation3], 1
    %352 = vsyncpa %s351, 1
    %353 = vsyncpa [#allocation6], 1
    %s354 = scalar_lea.sflag [#allocation6], 1
    %355 = vsyncpa %s354, 1
    %356 = vsyncpa [#allocation4], 1
    %s357 = scalar_lea.sflag [#allocation4], 1
    %358 = vsyncpa %s357, 1

</llo_original>
